<compile_context>
chip_gen: v7x
topology: tpu7x:2x2x1
jax: 0.10.0
libtpu: 0.0.40
codegen_flags: <defaults>
</compile_context>

<pallas_src>
import jax
import jax.numpy as jnp
from jax.experimental import pallas as pl
from jax.experimental.pallas import tpu as pltpu


# ----------------------------- Stage 1 kernel ------------------------------
def mlp_maxpool_kernel(x_ref,
                       w1_ref, s1_ref,
                       w2_ref, s2_ref,
                       w3_ref,
                       pooled_ref,
                       acc_ref):
    """Per-point MLP (k->64->128->1024) + running column-wise max over points.

    Layer-3 bias and ReLU are intentionally NOT applied here: they commute
    with the column-wise max and are applied exactly once in the head kernel
    (acc is initialised to -inf so the hoist is exact).
    """
    n = pl.program_id(1)

    @pl.when(n == 0)
    def _():
        acc_ref[...] = jnp.full_like(acc_ref, -jnp.inf)

    h = x_ref[...]                                                         # (TILE_N, k) bf16
    h = jnp.dot(h, w1_ref[...], preferred_element_type=jnp.float32) + s1_ref[...]
    h = jnp.maximum(h, 0.0).astype(jnp.bfloat16)                           # (TILE_N, 64)
    h = jnp.dot(h, w2_ref[...], preferred_element_type=jnp.float32) + s2_ref[...]
    h = jnp.maximum(h, 0.0).astype(jnp.bfloat16)                           # (TILE_N, 128)
    h = jnp.dot(h, w3_ref[...], preferred_element_type=jnp.float32)        # (TILE_N, 1024) f32

    tile_n = h.shape[0]
    # (TILE_N,1024) -> (TILE_N//8, 8, 1024): max over axis 0 is an elementwise
    # max of vreg-aligned (8,1024) slabs -> no XLU sublane reduce per tile.
    part = jnp.max(h.reshape(tile_n // 8, 8, 1024), axis=0)                # (8, 1024)
    acc_ref[...] = jnp.maximum(acc_ref[...], part)

    @pl.when(n == pl.num_programs(1) - 1)
    def _():
        # single 8 -> 1 sublane reduce per batch element
        pooled_ref[...] = jnp.max(acc_ref[...], axis=0, keepdims=True)     # (1, 1024)


# ----------------------------- Stage 2 kernel ------------------------------
def fc_head_kernel(g_ref, s3_ref,
                   w4_ref, s4_ref,
                   w5_ref, s5_ref,
                   w6_ref, b6_ref,
                   o_ref):
    """FC head over all B pooled rows at once: relu(g+s3) -> 512 -> 256 -> k*k."""
    g = jnp.maximum(g_ref[...] + s3_ref[...], 0.0).astype(jnp.bfloat16)    # (B, 1024)
    h = jnp.dot(g, w4_ref[...], preferred_element_type=jnp.float32) + s4_ref[...]
    h = jnp.maximum(h, 0.0).astype(jnp.bfloat16)                           # (B, 512)
    h = jnp.dot(h, w5_ref[...], preferred_element_type=jnp.float32) + s5_ref[...]
    h = jnp.maximum(h, 0.0).astype(jnp.bfloat16)                           # (B, 256)
    # identity matrix is folded into b6 in the wrapper; output is lane-padded
    o_ref[...] = jnp.dot(h, w6_ref[...], preferred_element_type=jnp.float32) + b6_ref[...]


# ------------------------------ parameters ---------------------------------
def make_params(key, k):
    """Deterministic synthetic parameters with the same shapes as the torch module."""
    dims = [(k, 64), (64, 128), (128, 1024), (1024, 512), (512, 256), (256, k * k)]
    params = {}
    keys = jax.random.split(key, len(dims) * 6)
    ki = 0
    for i, (cin, cout) in enumerate(dims, start=1):
        params[f"w{i}"] = (jax.random.normal(keys[ki], (cin, cout), jnp.float32)
                           * (1.0 / jnp.sqrt(cin))); ki += 1
        params[f"b{i}"] = jax.random.normal(keys[ki], (1, cout), jnp.float32) * 0.05; ki += 1
        if i <= 5:  # layers 1..5 have BatchNorm; fc3 does not
            params[f"gamma{i}"] = 1.0 + 0.1 * jax.random.normal(keys[ki], (1, cout), jnp.float32); ki += 1
            params[f"beta{i}"]  = 0.05 * jax.random.normal(keys[ki], (1, cout), jnp.float32); ki += 1
            params[f"mean{i}"]  = 0.05 * jax.random.normal(keys[ki], (1, cout), jnp.float32); ki += 1
            params[f"var{i}"]   = 0.5 + jax.random.uniform(keys[ki], (1, cout), jnp.float32); ki += 1
        else:
            ki += 4
    return params


def _bn_scale_shift(p, i, eps=1e-5):
    scale = p[f"gamma{i}"] / jnp.sqrt(p[f"var{i}"] + eps)
    shift = p[f"beta{i}"] - p[f"mean{i}"] * scale
    return scale, shift


def _round_up(x, m):
    return (x + m - 1) // m * m


def _pick_point_tiling(n, target=1024):
    """Return (tile_n, n_pad): tile_n a multiple of 8, n_pad a multiple of tile_n."""
    if n <= target:
        t = _round_up(max(n, 8), 8)
        return t, t
    return target, _round_up(n, target)


# -------------------------------- wrapper -----------------------------------
def tnet_forward(x, params, k, tile_n=None):
    """x: (B, k, N) float32, same layout as the PyTorch module input."""
    B, D, N = x.shape
    assert D == k

    if tile_n is None:
        tile_n, n_pad = _pick_point_tiling(N)
    else:
        assert tile_n % 8 == 0, "tile_n must be a multiple of 8"
        n_pad = _round_up(N, tile_n)
    num_n = n_pad // tile_n

    # channels-last, bf16 DMA tiles; pad N by repeating the last point (a
    # duplicated real point can never change the max).
    x_cl = jnp.transpose(x, (0, 2, 1)).astype(jnp.bfloat16)               # (B, N, k)
    if n_pad != N:
        x_cl = jnp.pad(x_cl, ((0, 0), (0, n_pad - N), (0, 0)), mode="edge")

    out_dim = k * k
    out_pad = pl.cdiv(out_dim, 128) * 128                                  # lane-dense output slab

    # ---- fold BN (inference) + bias into weights/shifts; bf16 matmul operands ----
    fw, fs = {}, {}
    for i in range(1, 6):
        s, t = _bn_scale_shift(params, i)
        fw[i] = (params[f"w{i}"] * s).astype(jnp.bfloat16)                 # column-wise scale
        fs[i] = (params[f"b{i}"] * s + t).astype(jnp.float32)              # folded shift (f32)
    eye_flat = jnp.eye(k, dtype=jnp.float32).reshape(1, out_dim)
    w6 = jnp.zeros((256, out_pad), jnp.float32).at[:, :out_dim].set(params["w6"]).astype(jnp.bfloat16)
    b6 = jnp.zeros((1, out_pad), jnp.float32).at[:, :out_dim].set(params["b6"] + eye_flat)

    # ---- stage 1: per-point MLP + running max-pool, grid = (B, point tiles) ----
    const2d = lambda b, n: (0, 0)   # resident, loop-invariant weights/shifts
    pooled = pl.pallas_call(
        mlp_maxpool_kernel,
        out_shape=jax.ShapeDtypeStruct((B, 1, 1024), jnp.float32),
        grid_spec=pltpu.PrefetchScalarGridSpec(
            num_scalar_prefetch=0,
            grid=(B, num_n),
            in_specs=[
                pl.BlockSpec((None, tile_n, k), lambda b, n: (b, n, 0)),
                pl.BlockSpec(fw[1].shape, const2d), pl.BlockSpec(fs[1].shape, const2d),
                pl.BlockSpec(fw[2].shape, const2d), pl.BlockSpec(fs[2].shape, const2d),
                pl.BlockSpec(fw[3].shape, const2d),
            ],
            out_specs=pl.BlockSpec((None, 1, 1024), lambda b, n: (b, 0, 0)),
            scratch_shapes=[pltpu.VMEM((8, 1024), jnp.float32)],
        ),
        compiler_params=pltpu.CompilerParams(
            dimension_semantics=("parallel", "arbitrary"),
            vmem_limit_bytes=64 * 1024 * 1024),
    )(x_cl, fw[1], fs[1], fw[2], fs[2], fw[3])

    # ---- stage 2: FC head over all B rows at once (tiny; full-array blocks) ----
    head = pl.pallas_call(
        fc_head_kernel,
        out_shape=jax.ShapeDtypeStruct((B, out_pad), jnp.float32),
    )(pooled.reshape(B, 1024), fs[3], fw[4], fs[4], fw[5], fs[5], w6, b6)

    return head[:, :out_dim].reshape(B, k, k)


# ------------------------------- reference ----------------------------------
def tnet_reference(x, params, k):
    """Pure-JAX f32 reference of the same forward pass (for correctness check)."""
    B, D, N = x.shape
    h = jnp.transpose(x, (0, 2, 1)).reshape(B * N, D).astype(jnp.float32)
    hp = jax.lax.Precision.HIGHEST
    for i in range(1, 4):
        s, t = _bn_scale_shift(params, i)
        h = jnp.dot(h, params[f"w{i}"], precision=hp) + params[f"b{i}"]
        h = jnp.maximum(h * s + t, 0.0)
    g = jnp.max(h.reshape(B, N, 1024), axis=1)
    h = g
    for i in range(4, 6):
        s, t = _bn_scale_shift(params, i)
        h = jnp.dot(h, params[f"w{i}"], precision=hp) + params[f"b{i}"]
        h = jnp.maximum(h * s + t, 0.0)
    h = jnp.dot(h, params["w6"], precision=hp) + params["b6"]
    return h.reshape(B, k, k) + jnp.eye(k, dtype=jnp.float32)[None]


if __name__ == "__main__":
    B, k, N = 2, 8, 16  # small shapes: batch=2, k=8 input channels, N=16 points
    key = jax.random.PRNGKey(0)
    kx, kp = jax.random.split(key)

    x = jax.random.normal(kx, (B, k, N), jnp.float32)
    params = make_params(kp, k)

    # tile_n=8 -> two point tiles per batch element, exercising the running-max
    # accumulator, the hoisted layer-3 bias/ReLU, and the separate FC-head kernel.
    out = tnet_forward(x, params, k, tile_n=8)
    out = jax.block_until_ready(out)

    ref = tnet_reference(x, params, k)
    assert out.shape == (B, k, k)
    # bf16 matmul operands with f32 accumulation -> relax tolerance vs f32-HIGHEST ref
    assert jnp.allclose(out, ref, rtol=3e-2, atol=3e-2), "Pallas output mismatch vs reference"

    print("KERNEL_OK")
</pallas_src>

<mosaic_0001>
module attributes {stable_mosaic.version = 11 : i64} {
  func.func @mlp_maxpool_kernel(%arg0: i32, %arg1: i32, %arg2: memref<1x8x8xbf16, #tpu.memory_space<vmem>>, %arg3: memref<8x64xbf16, #tpu.memory_space<vmem>>, %arg4: memref<1x64xf32, #tpu.memory_space<vmem>>, %arg5: memref<64x128xbf16, #tpu.memory_space<vmem>>, %arg6: memref<1x128xf32, #tpu.memory_space<vmem>>, %arg7: memref<128x1024xbf16, #tpu.memory_space<vmem>>, %arg8: memref<1x1x1024xf32, #tpu.memory_space<vmem>>, %arg9: memref<8x1024xf32, #tpu.memory_space<vmem>>) attributes {dimension_semantics = [#tpu.dimension_semantics<parallel>, #tpu.dimension_semantics<arbitrary>], iteration_bounds = array<i64: 2, 2>, scalar_prefetch = 0 : i64, scratch_operands = 1 : i64, tpu.core_type = #tpu.core_type<tc>, window_params = [{transform_indices = @transform_0, window_bounds = array<i64: 1, 8, 8>}, {pipeline_mode = #tpu.pipeline_mode<synchronous>, transform_indices = @transform_1, window_bounds = array<i64: 8, 64>}, {pipeline_mode = #tpu.pipeline_mode<synchronous>, transform_indices = @transform_2, window_bounds = array<i64: 1, 64>}, {pipeline_mode = #tpu.pipeline_mode<synchronous>, transform_indices = @transform_3, window_bounds = array<i64: 64, 128>}, {pipeline_mode = #tpu.pipeline_mode<synchronous>, transform_indices = @transform_4, window_bounds = array<i64: 1, 128>}, {pipeline_mode = #tpu.pipeline_mode<synchronous>, transform_indices = @transform_5, window_bounds = array<i64: 128, 1024>}, {transform_indices = @transform_6, window_bounds = array<i64: 1, 1, 1024>}]} {
    %c0_i32 = arith.constant 0 : i32
    %0 = arith.cmpi eq, %arg1, %c0_i32 : i32
    %1 = arith.extui %0 : i1 to i32
    %c0_i32_0 = arith.constant 0 : i32
    %2 = arith.cmpi ne, %1, %c0_i32_0 : i32
    scf.if %2 {
      %cst_23 = arith.constant 0xFF800000 : f32
      %31 = vector.broadcast %cst_23 : f32 to vector<8x1024xf32>
      %c0_24 = arith.constant 0 : index
      %c0_25 = arith.constant 0 : index
      %32 = vector.load %arg9[%c0_24, %c0_25] : memref<8x1024xf32, #tpu.memory_space<vmem>>, vector<8x1024xf32>
      tpu.vector_store %arg9[%c0_24, %c0_25], %31 {strides = array<i32>} : memref<8x1024xf32, #tpu.memory_space<vmem>>, vector<8x1024xf32>,
    } else {
    }
    %c0 = arith.constant 0 : index
    %c0_1 = arith.constant 0 : index
    %c0_2 = arith.constant 0 : index
    %3 = vector.load %arg2[%c0, %c0_1, %c0_2] : memref<1x8x8xbf16, #tpu.memory_space<vmem>>, vector<1x8x8xbf16>
    %4 = vector.shape_cast %3 : vector<1x8x8xbf16> to vector<8x8xbf16>
    %c0_3 = arith.constant 0 : index
    %c0_4 = arith.constant 0 : index
    %5 = vector.load %arg3[%c0_3, %c0_4] : memref<8x64xbf16, #tpu.memory_space<vmem>>, vector<8x64xbf16>
    %cst = arith.constant dense<0.000000e+00> : vector<8x64xf32>
    %6 = tpu.matmul %4, %5, %cst {dimension_numbers = #tpu.dot_dimension_numbers<[1], [0], [0], [1], [0, 0, 1, 1], [], []>} : vector<8x8xbf16>, vector<8x64xbf16>, vector<8x64xf32> -> vector<8x64xf32>
    %c0_5 = arith.constant 0 : index
    %c0_6 = arith.constant 0 : index
    %7 = vector.load %arg4[%c0_5, %c0_6] : memref<1x64xf32, #tpu.memory_space<vmem>>, vector<1x64xf32>
    %8 = vector.broadcast %7 : vector<1x64xf32> to vector<8x64xf32>
    %9 = arith.addf %6, %8 : vector<8x64xf32>
    %cst_7 = arith.constant 0.000000e+00 : f32
    %10 = vector.broadcast %cst_7 : f32 to vector<8x64xf32>
    %11 = arith.maximumf %9, %10 : vector<8x64xf32>
    %12 = arith.truncf %11 : vector<8x64xf32> to vector<8x64xbf16>
    %c0_8 = arith.constant 0 : index
    %c0_9 = arith.constant 0 : index
    %13 = vector.load %arg5[%c0_8, %c0_9] : memref<64x128xbf16, #tpu.memory_space<vmem>>, vector<64x128xbf16>
    %cst_10 = arith.constant dense<0.000000e+00> : vector<8x128xf32>
    %14 = tpu.matmul %12, %13, %cst_10 {dimension_numbers = #tpu.dot_dimension_numbers<[1], [0], [0], [1], [0, 0, 1, 1], [], []>} : vector<8x64xbf16>, vector<64x128xbf16>, vector<8x128xf32> -> vector<8x128xf32>
    %c0_11 = arith.constant 0 : index
    %c0_12 = arith.constant 0 : index
    %15 = vector.load %arg6[%c0_11, %c0_12] : memref<1x128xf32, #tpu.memory_space<vmem>>, vector<1x128xf32>
    %16 = vector.broadcast %15 : vector<1x128xf32> to vector<8x128xf32>
    %17 = arith.addf %14, %16 : vector<8x128xf32>
    %cst_13 = arith.constant 0.000000e+00 : f32
    %18 = vector.broadcast %cst_13 : f32 to vector<8x128xf32>
    %19 = arith.maximumf %17, %18 : vector<8x128xf32>
    %20 = arith.truncf %19 : vector<8x128xf32> to vector<8x128xbf16>
    %c0_14 = arith.constant 0 : index
    %c0_15 = arith.constant 0 : index
    %21 = vector.load %arg7[%c0_14, %c0_15] : memref<128x1024xbf16, #tpu.memory_space<vmem>>, vector<128x1024xbf16>
    %cst_16 = arith.constant dense<0.000000e+00> : vector<8x1024xf32>
    %22 = tpu.matmul %20, %21, %cst_16 {dimension_numbers = #tpu.dot_dimension_numbers<[1], [0], [0], [1], [0, 0, 1, 1], [], []>} : vector<8x128xbf16>, vector<128x1024xbf16>, vector<8x1024xf32> -> vector<8x1024xf32>
    %23 = vector.shape_cast %22 : vector<8x1024xf32> to vector<1x8x1024xf32>
    %cst_17 = arith.constant dense<0xFF800000> : vector<8x1024xf32>
    %24 = vector.multi_reduction <maximumf>, %23, %cst_17 [0] : vector<1x8x1024xf32> to vector<8x1024xf32>
    %c0_18 = arith.constant 0 : index
    %c0_19 = arith.constant 0 : index
    %25 = vector.load %arg9[%c0_18, %c0_19] : memref<8x1024xf32, #tpu.memory_space<vmem>>, vector<8x1024xf32>
    %26 = arith.maximumf %25, %24 : vector<8x1024xf32>
    %c0_20 = arith.constant 0 : index
    %c0_21 = arith.constant 0 : index
    %27 = vector.load %arg9[%c0_20, %c0_21] : memref<8x1024xf32, #tpu.memory_space<vmem>>, vector<8x1024xf32>
    tpu.vector_store %arg9[%c0_20, %c0_21], %26 {strides = array<i32>} : memref<8x1024xf32, #tpu.memory_space<vmem>>, vector<8x1024xf32>,
    %c1_i32 = arith.constant 1 : i32
    %28 = arith.cmpi eq, %arg1, %c1_i32 : i32
    %29 = arith.extui %28 : i1 to i32
    %c0_i32_22 = arith.constant 0 : i32
    %30 = arith.cmpi ne, %29, %c0_i32_22 : i32
    scf.if %30 {
      %c0_23 = arith.constant 0 : index
      %c0_24 = arith.constant 0 : index
      %31 = vector.load %arg9[%c0_23, %c0_24] : memref<8x1024xf32, #tpu.memory_space<vmem>>, vector<8x1024xf32>
      %cst_25 = arith.constant dense<0xFF800000> : vector<1024xf32>
      %32 = vector.multi_reduction <maximumf>, %31, %cst_25 [0] : vector<8x1024xf32> to vector<1024xf32>
      %33 = vector.shape_cast %32 : vector<1024xf32> to vector<1x1024xf32>
      %c0_26 = arith.constant 0 : index
      %c0_27 = arith.constant 0 : index
      %c0_28 = arith.constant 0 : index
      %34 = vector.load %arg8[%c0_26, %c0_27, %c0_28] : memref<1x1x1024xf32, #tpu.memory_space<vmem>>, vector<1x1x1024xf32>
      %35 = vector.shape_cast %34 : vector<1x1x1024xf32> to vector<1x1024xf32>
      %36 = vector.shape_cast %33 : vector<1x1024xf32> to vector<1x1x1024xf32>
      tpu.vector_store %arg8[%c0_26, %c0_27, %c0_28], %36 {strides = array<i32>} : memref<1x1x1024xf32, #tpu.memory_space<vmem>>, vector<1x1x1024xf32>,
    } else {
    }
    return
  }
  func.func @transform_0(%arg0: i32, %arg1: i32) -> (i32, i32, i32) {
    %c0_i32 = arith.constant 0 : i32
    %c0_i32_0 = arith.constant 0 : i32
    return %arg0, %arg1, %c0_i32 : i32, i32, i32
  }
  func.func @transform_1(%arg0: i32, %arg1: i32) -> (i32, i32) {
    %c0_i32 = arith.constant 0 : i32
    %c0_i32_0 = arith.constant 0 : i32
    %c0_i32_1 = arith.constant 0 : i32
    return %c0_i32, %c0_i32_0 : i32, i32
  }
  func.func @transform_2(%arg0: i32, %arg1: i32) -> (i32, i32) {
    %c0_i32 = arith.constant 0 : i32
    %c0_i32_0 = arith.constant 0 : i32
    %c0_i32_1 = arith.constant 0 : i32
    return %c0_i32, %c0_i32_0 : i32, i32
  }
  func.func @transform_3(%arg0: i32, %arg1: i32) -> (i32, i32) {
    %c0_i32 = arith.constant 0 : i32
    %c0_i32_0 = arith.constant 0 : i32
    %c0_i32_1 = arith.constant 0 : i32
    return %c0_i32, %c0_i32_0 : i32, i32
  }
  func.func @transform_4(%arg0: i32, %arg1: i32) -> (i32, i32) {
    %c0_i32 = arith.constant 0 : i32
    %c0_i32_0 = arith.constant 0 : i32
    %c0_i32_1 = arith.constant 0 : i32
    return %c0_i32, %c0_i32_0 : i32, i32
  }
  func.func @transform_5(%arg0: i32, %arg1: i32) -> (i32, i32) {
    %c0_i32 = arith.constant 0 : i32
    %c0_i32_0 = arith.constant 0 : i32
    %c0_i32_1 = arith.constant 0 : i32
    return %c0_i32, %c0_i32_0 : i32, i32
  }
  func.func @transform_6(%arg0: i32, %arg1: i32) -> (i32, i32, i32) {
    %c0_i32 = arith.constant 0 : i32
    %c0_i32_0 = arith.constant 0 : i32
    %c0_i32_1 = arith.constant 0 : i32
    return %arg0, %c0_i32, %c0_i32_0 : i32, i32, i32
  }
}

</mosaic_0001>

<llo_original>
// kernel: tpu_custom_call.1
$region0: #{tpu_custom_call.1}
  #allocation0 [shape = 'u32[]', space=smem, size = 0x4, offset = 0x4, fixed_abs, tag = 'smem constant byte address 0x4 - core index']
  #allocation1 [shape = 'u32[144,128]{1,0:T(1,128)}', space=vmem, size = 0x12000, scoped, tag = 'internal scratch']
  #allocation2 [shape = 'f32[8,1024]{1,0:T(8,128)}', space=vmem, size = 0x8000, scoped, tag = 'scratch operand']
  %s0 = inlined_call_operand.hbm [shape: bf16[2,16,8], index: 0, kind: input, shape index: {}]
  %s1 = inlined_call_operand.hbm [shape: bf16[8,64], index: 1, kind: input, shape index: {}]
  %s2 = inlined_call_operand.hbm [shape: f32[1,64], index: 2, kind: input, shape index: {}]
  %s3 = inlined_call_operand.hbm [shape: bf16[64,128], index: 3, kind: input, shape index: {}]
  %s4 = inlined_call_operand.hbm [shape: f32[1,128], index: 4, kind: input, shape index: {}]
  %s5 = inlined_call_operand.hbm [shape: bf16[128,1024], index: 5, kind: input, shape index: {}]
  %s6 = inlined_call_operand.hbm [shape: f32[2,1,1024], index: 6, kind: output, shape index: {}]
  %s7 = sld [smem:[#allocation0]]
  $region89: #{tpu_custom_call.1} parent=0
    _
  %s9 = ssub.s32 1, %s7
  %s10 = scalar_select 0, %s9, %s7
  $region1: #{tpu_custom_call.1} parent=0
    #allocation3 [shape = 'u8[4096]{0}', space=vmem, size = 0x1000, scoped, tag = 'input window, operand 0']
    #allocation4 [shape = 's32[2]{0}', space=sflag, size = 0x8, scoped, tag = 'scoped memory for tpu_custom_call.1']
    #allocation5 [shape = 's32[2]{0}', space=sflag, size = 0x8, scoped, tag = 'scoped memory for tpu_custom_call.1']
    #allocation6 [shape = 'u8[2048]{0}', space=vmem, size = 0x800, scoped, tag = 'input window, operand 1, single buffered']
    #allocation7 [shape = 's32[1]{0}', space=sflag, size = 0x4, scoped, tag = 'scoped memory for tpu_custom_call.1']
    #allocation8 [shape = 'u8[512]{0}', space=vmem, size = 0x400, scoped, tag = 'input window, operand 2, single buffered']
    #allocation9 [shape = 'u8[16384]{0}', space=vmem, size = 0x4000, scoped, tag = 'input window, operand 3, single buffered']
    #allocation10 [shape = 's32[1]{0}', space=sflag, size = 0x4, scoped, tag = 'scoped memory for tpu_custom_call.1']
    #allocation11 [shape = 'u8[512]{0}', space=vmem, size = 0x400, scoped, tag = 'input window, operand 4, single buffered']
    #allocation12 [shape = 'u8[262144]{0}', space=vmem, size = 0x40000, scoped, tag = 'input window, operand 5, single buffered']
    #allocation13 [shape = 's32[1]{0}', space=sflag, size = 0x4, scoped, tag = 'scoped memory for tpu_custom_call.1']
    #allocation14 [shape = 'u8[8192]{0}', space=vmem, size = 0x2000, scoped, tag = 'output window, operand 0']
    %11 = vsyncpa [#allocation4], 0
    %s12 = scalar_lea.sflag [#allocation4], 1
    %13 = vsyncpa %s12, 0
    %14 = vsyncpa [#allocation7], 0
    %15 = vsyncpa [#allocation10], 0
    %16 = vsyncpa [#allocation13], 0
    %17 = vsyncpa [#allocation5], 0
    %s18 = scalar_lea.sflag [#allocation5], 1
    %19 = vsyncpa %s18, 0
    loop: start=0, step=1, limit=6
    $region2: #{tpu_custom_call.1} parent=1 // loop_pre_header
      _
    $region3: #{tpu_custom_call.1} parent=1 // loop_header
      %s21 = sphi 0, %s25
      %p22 = scmp.ge.s32.totalorder %s21, 6
      %s28 = sphi 0, %s40
      %s29 = sphi 0, %s36
      %s30 = sphi 0, %s28
      %s31 = sphi 0, %s29
      %s32 = sphi 0, %s30
      %s33 = sphi 0, %s31
      %s45 = sphi 0, %s47
      %s48 = sphi 0, %s45
      %s49 = sphi 0, %s48
      %s65 = sphi 0, %s49
      %s69 = sphi 0, %s69
      %s71 = sphi 0, %s69
      %s72 = sphi 0, %s71
      %s86 = sphi 0, %s72
      %s90 = sphi 0, %s90
      %s92 = sphi 0, %s90
      %s93 = sphi 0, %s92
      %s107 = sphi 0, %s93
      %s111 = sphi 0, %s111
      %s113 = sphi 0, %s111
      %s114 = sphi 0, %s113
      %s128 = sphi 0, %s114
      %s132 = sphi 0, %s132
      %s134 = sphi 0, %s132
      %s135 = sphi 0, %s134
      %s149 = sphi 0, %s135
      %s153 = sphi 0, %s153
      %s155 = sphi 0, %s153
      %s156 = sphi 0, %s155
      %s170 = sphi 0, %s156
      %s176 = sphi 0, %s178
      %s179 = sphi 0, %s176
      %s180 = sphi 0, %s179
      %s196 = sphi 0, %s180
    $region4: #{tpu_custom_call.1} parent=1 // loop_header_branch
      %24 = sbr.rel (%p22) target = $region8
    $region5: #{tpu_custom_call.1} parent=1 // loop_body
      %s26 = ssub.s32 %s21, 1
      %s27 = ssub.s32 %s21, 2
      %s34 = sadd.s32 1, %s29
      %p35 = scmp.ge.s32.totalorder %s34, 2
      %s36 = scalar_select %p35, 0, %s34
      %s37 = sadd.s32 1, %s28
      %s38 = scalar_select %p35, %s37, %s28
      %p39 = scmp.ge.s32.totalorder %s38, 2
      %s40 = scalar_select %p39, 0, %s38
      %s41 = ssub.s32 %s28, %s40
      %s42 = ssub.s32 %s29, %s36
      %s43 = sor.u32 %s41, %s42
      %p44 = scmp.eq.s32.totalorder %s43, 0
      %s46 = sadd.s32 %s45, 1
      %s47 = scalar_select %p44, %s45, %s46
      %p50 = pneg %p44
      %p51 = scmp.eq.s32.totalorder %s21, 3
      %p52 = por %p50, %p51
      %p53 = scmp.ne.s32.totalorder %s45, %s48
      %p54 = scmp.eq.s32.totalorder %s21, 0
      %p55 = por %p53, %p54
      %p56 = scmp.ne.s32.totalorder %s45, %s48
      %p57 = scmp.eq.s32.totalorder %s26, 3
      %p58 = por %p56, %p57
      %p59 = scmp.ne.s32.totalorder %s48, %s49
      %p60 = scmp.eq.s32.totalorder %s26, 0
      %p61 = por %p59, %p60
      %p62 = scmp.ne.s32.totalorder %s48, %s49
      %p63 = scmp.eq.s32.totalorder %s27, 3
      %p64 = por %p62, %p63
      %p66 = scmp.ne.s32.totalorder %s49, %s65
      %p67 = scmp.eq.s32.totalorder %s27, 0
      %p68 = por %p66, %p67
      %s70 = sadd.s32 %s69, 1
      %p73 = scmp.eq.s32.totalorder %s21, 3
      %p74 = scmp.ne.s32.totalorder %s69, %s71
      %p75 = scmp.eq.s32.totalorder %s21, 0
      %p76 = por %p74, %p75
      %p77 = scmp.ne.s32.totalorder %s69, %s71
      %p78 = scmp.eq.s32.totalorder %s26, 3
      %p79 = por %p77, %p78
      %p80 = scmp.ne.s32.totalorder %s71, %s72
      %p81 = scmp.eq.s32.totalorder %s26, 0
      %p82 = por %p80, %p81
      %p83 = scmp.ne.s32.totalorder %s71, %s72
      %p84 = scmp.eq.s32.totalorder %s27, 3
      %p85 = por %p83, %p84
      %p87 = scmp.ne.s32.totalorder %s72, %s86
      %p88 = scmp.eq.s32.totalorder %s27, 0
      %p89 = por %p87, %p88
      %s91 = sadd.s32 %s90, 1
      %p94 = scmp.eq.s32.totalorder %s21, 3
      %p95 = scmp.ne.s32.totalorder %s90, %s92
      %p96 = scmp.eq.s32.totalorder %s21, 0
      %p97 = por %p95, %p96
      %p98 = scmp.ne.s32.totalorder %s90, %s92
      %p99 = scmp.eq.s32.totalorder %s26, 3
      %p100 = por %p98, %p99
      %p101 = scmp.ne.s32.totalorder %s92, %s93
      %p102 = scmp.eq.s32.totalorder %s26, 0
      %p103 = por %p101, %p102
      %p104 = scmp.ne.s32.totalorder %s92, %s93
      %p105 = scmp.eq.s32.totalorder %s27, 3
      %p106 = por %p104, %p105
      %p108 = scmp.ne.s32.totalorder %s93, %s107
      %p109 = scmp.eq.s32.totalorder %s27, 0
      %p110 = por %p108, %p109
      %s112 = sadd.s32 %s111, 1
      %p115 = scmp.eq.s32.totalorder %s21, 3
      %p116 = scmp.ne.s32.totalorder %s111, %s113
      %p117 = scmp.eq.s32.totalorder %s21, 0
      %p118 = por %p116, %p117
      %p119 = scmp.ne.s32.totalorder %s111, %s113
      %p120 = scmp.eq.s32.totalorder %s26, 3
      %p121 = por %p119, %p120
      %p122 = scmp.ne.s32.totalorder %s113, %s114
      %p123 = scmp.eq.s32.totalorder %s26, 0
      %p124 = por %p122, %p123
      %p125 = scmp.ne.s32.totalorder %s113, %s114
      %p126 = scmp.eq.s32.totalorder %s27, 3
      %p127 = por %p125, %p126
      %p129 = scmp.ne.s32.totalorder %s114, %s128
      %p130 = scmp.eq.s32.totalorder %s27, 0
      %p131 = por %p129, %p130
      %s133 = sadd.s32 %s132, 1
      %p136 = scmp.eq.s32.totalorder %s21, 3
      %p137 = scmp.ne.s32.totalorder %s132, %s134
      %p138 = scmp.eq.s32.totalorder %s21, 0
      %p139 = por %p137, %p138
      %p140 = scmp.ne.s32.totalorder %s132, %s134
      %p141 = scmp.eq.s32.totalorder %s26, 3
      %p142 = por %p140, %p141
      %p143 = scmp.ne.s32.totalorder %s134, %s135
      %p144 = scmp.eq.s32.totalorder %s26, 0
      %p145 = por %p143, %p144
      %p146 = scmp.ne.s32.totalorder %s134, %s135
      %p147 = scmp.eq.s32.totalorder %s27, 3
      %p148 = por %p146, %p147
      %p150 = scmp.ne.s32.totalorder %s135, %s149
      %p151 = scmp.eq.s32.totalorder %s27, 0
      %p152 = por %p150, %p151
      %s154 = sadd.s32 %s153, 1
      %p157 = scmp.eq.s32.totalorder %s21, 3
      %p158 = scmp.ne.s32.totalorder %s153, %s155
      %p159 = scmp.eq.s32.totalorder %s21, 0
      %p160 = por %p158, %p159
      %p161 = scmp.ne.s32.totalorder %s153, %s155
      %p162 = scmp.eq.s32.totalorder %s26, 3
      %p163 = por %p161, %p162
      %p164 = scmp.ne.s32.totalorder %s155, %s156
      %p165 = scmp.eq.s32.totalorder %s26, 0
      %p166 = por %p164, %p165
      %p167 = scmp.ne.s32.totalorder %s155, %s156
      %p168 = scmp.eq.s32.totalorder %s27, 3
      %p169 = por %p167, %p168
      %p171 = scmp.ne.s32.totalorder %s156, %s170
      %p172 = scmp.eq.s32.totalorder %s27, 0
      %p173 = por %p171, %p172
      %s174 = ssub.s32 %s28, %s40
      %p175 = scmp.eq.s32.totalorder %s174, 0
      %s177 = sadd.s32 %s176, 1
      %s178 = scalar_select %p175, %s176, %s177
      %p181 = pneg %p175
      %p182 = scmp.eq.s32.totalorder %s21, 3
      %p183 = por %p181, %p182
      %p184 = scmp.ne.s32.totalorder %s176, %s179
      %p185 = scmp.eq.s32.totalorder %s21, 0
      %p186 = por %p184, %p185
      %p187 = scmp.ne.s32.totalorder %s176, %s179
      %p188 = scmp.eq.s32.totalorder %s26, 3
      %p189 = por %p187, %p188
      %p190 = scmp.ne.s32.totalorder %s179, %s180
      %p191 = scmp.eq.s32.totalorder %s26, 0
      %p192 = por %p190, %p191
      %p193 = scmp.ne.s32.totalorder %s179, %s180
      %p194 = scmp.eq.s32.totalorder %s27, 3
      %p195 = por %p193, %p194
      %p197 = scmp.ne.s32.totalorder %s180, %s196
      %p198 = scmp.eq.s32.totalorder %s27, 0
      %p199 = por %p197, %p198
      %p200 = scmp.le.s32.totalorder 1, %s21
      %p201 = scmp.lt.s32.totalorder %s21, 5
      %p202 = pnand %p200, %p201
      %p203 = pneg %p202
      // Predicated region
      $region9: #{tpu_custom_call.1} parent=5 // pred_check
        _
      $region10: #{tpu_custom_call.1} parent=5 // pred_check_branch
        %205 = sbr.rel (%p202) target = $region12
      $region11: #{tpu_custom_call.1} parent=5 // pred_region
        %s206 = ssub.s32 %s21, 1
        // Predicated region
        $region13: #{tpu_custom_call.1} parent=11 // pred_check
          %p207 = pneg %p82
        $region14: #{tpu_custom_call.1} parent=11 // pred_check_branch
          %209 = sbr.rel (%p207) target = $region16
        $region15: #{tpu_custom_call.1} parent=11 // pred_region
          %s211 = ssub.s32 64, 64
          %212 = vsyncadd [#allocation7], %s211
          %s214 = sshll.u32 [#allocation6], 4
          %s215 = int_to_ptr.vmem [resolvable:$true] %s214
          %217 = dma.hbm_to_vmem [thread:$0]  %s1, 64, %s215, [#allocation7]
        $region16: #{tpu_custom_call.1} parent=11 // pred_fallthru
          _
        // Predicated region
        $region17: #{tpu_custom_call.1} parent=11 // pred_check
          %p218 = pneg %p103
        $region18: #{tpu_custom_call.1} parent=11 // pred_check_branch
          %220 = sbr.rel (%p218) target = $region20
        $region19: #{tpu_custom_call.1} parent=11 // pred_region
          %s222 = ssub.s32 16, 16
          %223 = vsyncadd [#allocation7], %s222
          %s225 = sshll.u32 [#allocation8], 4
          %s226 = int_to_ptr.vmem [resolvable:$true] %s225
          %228 = dma.hbm_to_vmem [thread:$0]  %s2, 16, %s226, [#allocation7]
        $region20: #{tpu_custom_call.1} parent=11 // pred_fallthru
          _
        // Predicated region
        $region21: #{tpu_custom_call.1} parent=11 // pred_check
          %p229 = pneg %p124
        $region22: #{tpu_custom_call.1} parent=11 // pred_check_branch
          %231 = sbr.rel (%p229) target = $region24
        $region23: #{tpu_custom_call.1} parent=11 // pred_region
          %s233 = ssub.s32 512, 512
          %234 = vsyncadd [#allocation10], %s233
          %s235 = sshll.u32 [#allocation9], 4
          %s236 = int_to_ptr.vmem [resolvable:$true] %s235
          %241 = dma.hbm_to_vmem [thread:$0]  %s3, 512, %s236, [#allocation10], 64, 64, 4
        $region24: #{tpu_custom_call.1} parent=11 // pred_fallthru
          _
        // Predicated region
        $region25: #{tpu_custom_call.1} parent=11 // pred_check
          %p242 = pneg %p145
        $region26: #{tpu_custom_call.1} parent=11 // pred_check_branch
          %244 = sbr.rel (%p242) target = $region28
        $region27: #{tpu_custom_call.1} parent=11 // pred_region
          %s246 = ssub.s32 16, 16
          %247 = vsyncadd [#allocation10], %s246
          %s249 = sshll.u32 [#allocation11], 4
          %s250 = int_to_ptr.vmem [resolvable:$true] %s249
          %252 = dma.hbm_to_vmem [thread:$0]  %s4, 16, %s250, [#allocation10]
        $region28: #{tpu_custom_call.1} parent=11 // pred_fallthru
          _
        // Predicated region
        $region29: #{tpu_custom_call.1} parent=11 // pred_check
          %p253 = pneg %p166
        $region30: #{tpu_custom_call.1} parent=11 // pred_check_branch
          %255 = sbr.rel (%p253) target = $region32
        $region31: #{tpu_custom_call.1} parent=11 // pred_region
          %s257 = ssub.s32 8192, 8192
          %258 = vsyncadd [#allocation13], %s257
          %s259 = sshll.u32 [#allocation12], 4
          %s260 = int_to_ptr.vmem [resolvable:$true] %s259
          %265 = dma.hbm_to_vmem [thread:$0]  %s5, 8192, %s260, [#allocation13], 512, 512, 32
        $region32: #{tpu_custom_call.1} parent=11 // pred_fallthru
          _
      $region12: #{tpu_custom_call.1} parent=5 // pred_fallthru
        _
      %p266 = scmp.lt.s32.totalorder %s21, 4
      // Predicated region
      $region33: #{tpu_custom_call.1} parent=5 // pred_check
        %p267 = pneg %p266
      $region34: #{tpu_custom_call.1} parent=5 // pred_check_branch
        %269 = sbr.rel (%p267) target = $region36
      $region35: #{tpu_custom_call.1} parent=5 // pred_region
        // Predicated region
        $region37: #{tpu_custom_call.1} parent=35 // pred_check
          %p270 = pneg %p55
        $region38: #{tpu_custom_call.1} parent=35 // pred_check_branch
          %272 = sbr.rel (%p270) target = $region40
        $region39: #{tpu_custom_call.1} parent=35 // pred_region
          %s273 = sand.u32 %s45, 1
          %s274 = scalar_lea.sflag [#allocation4], %s273
          %s275 = sand.u32 %s45, 1
          %s276 = smul.addr %s275, 4
          %s277 = scalar_lea.vmem [#allocation3], %s276
          %s279 = ssub.s32 64, 64
          %280 = vsyncadd %s274, %s279
          %s281 = smul.addr %s28, 2
          %s282 = sadd.s32 %s29, %s281
          %s283 = smul.addr %s282, 64
          %s284 = scalar_lea.hbm %s0, %s283
          %s286 = sshll.u32 %s277, 4
          %s287 = int_to_ptr.vmem [resolvable:$true] %s286
          %289 = dma.hbm_to_vmem [thread:$0]  %s284, 64, %s287, %s274
        $region40: #{tpu_custom_call.1} parent=35 // pred_fallthru
          _
      $region36: #{tpu_custom_call.1} parent=5 // pred_fallthru
        _
      %p290 = scmp.le.s32.totalorder 1, %s21
      %p291 = scmp.lt.s32.totalorder %s21, 5
      %p292 = pnand %p290, %p291
      %p293 = pneg %p292
      // Predicated region
      $region41: #{tpu_custom_call.1} parent=5 // pred_check
        _
      $region42: #{tpu_custom_call.1} parent=5 // pred_check_branch
        %295 = sbr.rel (%p292) target = $region44
      $region43: #{tpu_custom_call.1} parent=5 // pred_region
        %s296 = ssub.s32 %s21, 1
        %s297 = sand.u32 %s48, 1
        %s298 = scalar_lea.sflag [#allocation4], %s297
        %s299 = sand.u32 %s48, 1
        %s300 = smul.addr %s299, 4
        %s301 = scalar_lea.vmem [#allocation3], %s300
        // Predicated region
        $region45: #{tpu_custom_call.1} parent=43 // pred_check
          %p302 = pneg %p61
        $region46: #{tpu_custom_call.1} parent=43 // pred_check_branch
          %304 = sbr.rel (%p302) target = $region48
        $region47: #{tpu_custom_call.1} parent=43 // pred_region
          %305 = dma.done %s298, 64
        $region48: #{tpu_custom_call.1} parent=43 // pred_fallthru
          _
        // Predicated region
        $region49: #{tpu_custom_call.1} parent=43 // pred_check
          %p306 = pneg %p82
        $region50: #{tpu_custom_call.1} parent=43 // pred_check_branch
          %308 = sbr.rel (%p306) target = $region52
        $region51: #{tpu_custom_call.1} parent=43 // pred_region
          %309 = dma.done [#allocation7], 64
        $region52: #{tpu_custom_call.1} parent=43 // pred_fallthru
          _
        // Predicated region
        $region53: #{tpu_custom_call.1} parent=43 // pred_check
          %p310 = pneg %p103
        $region54: #{tpu_custom_call.1} parent=43 // pred_check_branch
          %312 = sbr.rel (%p310) target = $region56
        $region55: #{tpu_custom_call.1} parent=43 // pred_region
          %313 = dma.done [#allocation7], 16
        $region56: #{tpu_custom_call.1} parent=43 // pred_fallthru
          _
        // Predicated region
        $region57: #{tpu_custom_call.1} parent=43 // pred_check
          %p314 = pneg %p124
        $region58: #{tpu_custom_call.1} parent=43 // pred_check_branch
          %316 = sbr.rel (%p314) target = $region60
        $region59: #{tpu_custom_call.1} parent=43 // pred_region
          %317 = dma.done [#allocation10], 512
        $region60: #{tpu_custom_call.1} parent=43 // pred_fallthru
          _
        // Predicated region
        $region61: #{tpu_custom_call.1} parent=43 // pred_check
          %p318 = pneg %p145
        $region62: #{tpu_custom_call.1} parent=43 // pred_check_branch
          %320 = sbr.rel (%p318) target = $region64
        $region63: #{tpu_custom_call.1} parent=43 // pred_region
          %321 = dma.done [#allocation10], 16
        $region64: #{tpu_custom_call.1} parent=43 // pred_fallthru
          _
        // Predicated region
        $region65: #{tpu_custom_call.1} parent=43 // pred_check
          %p322 = pneg %p166
        $region66: #{tpu_custom_call.1} parent=43 // pred_check_branch
          %324 = sbr.rel (%p322) target = $region68
        $region67: #{tpu_custom_call.1} parent=43 // pred_region
          %325 = dma.done [#allocation13], 8192
        $region68: #{tpu_custom_call.1} parent=43 // pred_fallthru
          _
        %s326 = sand.u32 %s48, 1
        %s327 = scalar_lea.sflag [#allocation4], %s326
        %s328 = sand.u32 %s48, 1
        %s329 = smul.addr %s328, 4
        %s330 = scalar_lea.vmem [#allocation3], %s329
        %p331 = pneg %p61
        %p332 = pneg %p58
        %p333 = pneg %p82
        %p334 = pneg %p79
        %p335 = pneg %p103
        %p336 = pneg %p100
        %p337 = pneg %p124
        %p338 = pneg %p121
        %p339 = pneg %p145
        %p340 = pneg %p142
        %p341 = pneg %p166
        %p342 = pneg %p163
        %p343 = pneg %p192
        %p344 = pneg %p189
        %s345 = sand.u32 %s179, 1
        %s346 = scalar_lea.sflag [#allocation5], %s345
        %s347 = sand.u32 %s179, 1
        %s348 = smul.addr %s347, 8
        %s349 = scalar_lea.vmem [#allocation14], %s348
        %p351 = scmp.eq.s32.totalorder %s31, 0
        // Predicated region
        $region69: #{tpu_custom_call.1} parent=43 // pred_check
          %p352 = pneg %p351
        $region70: #{tpu_custom_call.1} parent=43 // pred_check_branch
          %354 = sbr.rel (%p352) target = $region72
        $region71: #{tpu_custom_call.1} parent=43 // pred_region
          %355 = vst [vmem:[#allocation2] sm:$0xff] -inf
          %356 = vst [vmem:[#allocation2 + $0x8] sm:$0xff] -inf
          %357 = vst [vmem:[#allocation2 + $0x10] sm:$0xff] -inf
          %358 = vst [vmem:[#allocation2 + $0x18] sm:$0xff] -inf
          %359 = vst [vmem:[#allocation2 + $0x20] sm:$0xff] -inf
          %360 = vst [vmem:[#allocation2 + $0x28] sm:$0xff] -inf
          %361 = vst [vmem:[#allocation2 + $0x30] sm:$0xff] -inf
          %362 = vst [vmem:[#allocation2 + $0x38] sm:$0xff] -inf
        $region72: #{tpu_custom_call.1} parent=43 // pred_fallthru
          _
        %v363 = vld [vmem:[%s301] sm:$0xf]
        %v364 = vld [vmem:[#allocation6] sm:$0xf]
        %v365 = vld [vmem:[#allocation8] sm:$0x1]
        %v367 = vlaneseq
        %v368 = vshrl.u32 %v367, 7
        %v369 = vsub.s32 0, %v368
        %v370 = vrot.slane %v365, %v369
        %vm372 = vcmask 64512
        %v374 = vsel %vm372, %v363, 0
        %vm376 = vcmask 1043456
        %v378 = vsel %vm376, %v364, 0
        %380 = vmatprep.subr.bf16.mxu0 0
        %381 = vmatpush1.bf16.msra.mxu0 %v378
        %382 = vmatprep.subr.bf16.mxu0 0
        %383 = vmatpush1.bf16.msra.mxu0 0
        %384 = vmatprep.subr.bf16.mxu0 0
        %385 = vmatpush1.bf16.msra.mxu0 0
        %386 = vmatprep.subr.bf16.mxu0 0
        %387 = vmatpush1.bf16.msra.mxu0 0
        %388 = vmatprep.subr.bf16.mxu0 0
        %389 = vmatpush1.bf16.msra.mxu0 0
        %390 = vmatprep.subr.bf16.mxu0 0
        %391 = vmatpush1.bf16.msra.mxu0 0
        %392 = vmatprep.subr.bf16.mxu0 0
        %393 = vmatpush1.bf16.msra.mxu0 0
        %394 = vmatprep.subr.bf16.mxu0 0
        %395 = vmatpush1.bf16.msra.mxu0 0
        %396 = vmatprep.subr.bf16.mxu0 0
        %397 = vmatpush1.bf16.msra.mxu0 0
        %398 = vmatprep.subr.bf16.mxu0 0
        %399 = vmatpush1.bf16.msra.mxu0 0
        %400 = vmatprep.subr.bf16.mxu0 0
        %401 = vmatpush1.bf16.msra.mxu0 0
        %402 = vmatprep.subr.bf16.mxu0 0
        %403 = vmatpush1.bf16.msra.mxu0 0
        %404 = vmatprep.subr.bf16.mxu0 0
        %405 = vmatpush1.bf16.msra.mxu0 0
        %406 = vmatprep.subr.bf16.mxu0 0
        %407 = vmatpush1.bf16.msra.mxu0 0
        %408 = vmatprep.subr.bf16.mxu0 0
        %409 = vmatpush1.bf16.msra.mxu0 0
        %410 = vmatprep.subr.bf16.mxu0 0
        %411 = vmatpush1.bf16.msra.mxu0 0
        %412 = vmatprep.mubr.bf16.mxu0 0
        %413 = vmatmul.mubr.bf16.gmra.mrb[0].mxu0 %v374
        %v414 = vpop.f32.mrb[0].mxu0
        %v415 = vadd.f32 %v370, %v414
        %v416 = vpop.f32.mrb[0].mxu0
        %v417 = vpop.f32.mrb[0].mxu0
        %v418 = vpop.f32.mrb[0].mxu0
        %419 = vdwg.mxu0
        %v420 = vmax.f32 %v415, 0.0
        %v421 = vpack.c.bf16 %v420, %v420
        %v422 = vld [vmem:[#allocation9] sm:$0xf]
        %v423 = vld [vmem:[#allocation9 + $0x4] sm:$0xf]
        %v424 = vld [vmem:[#allocation9 + $0x8] sm:$0xf]
        %v425 = vld [vmem:[#allocation9 + $0xc] sm:$0xf]
        %v426 = vld [vmem:[#allocation9 + $0x10] sm:$0xf]
        %v427 = vld [vmem:[#allocation9 + $0x14] sm:$0xf]
        %v428 = vld [vmem:[#allocation9 + $0x18] sm:$0xf]
        %v429 = vld [vmem:[#allocation9 + $0x1c] sm:$0xf]
        %v430 = vld [vmem:[#allocation11] sm:$0x1]
        %v432 = vlaneseq
        %v433 = vshrl.u32 %v432, 7
        %v434 = vsub.s32 0, %v433
        %v435 = vrot.slane %v430, %v434
        %v445 = vunpack.c.l.b16 %v422
        %v446 = vunpack.c.l.b16 %v423
        %v447 = vunpack.c.l.b16 %v424
        %v448 = vunpack.c.l.b16 %v425
        %v449 = vunpack.c.l.b16 %v426
        %v450 = vunpack.c.l.b16 %v427
        %v451 = vunpack.c.l.b16 %v428
        %v452 = vunpack.c.l.b16 %v429
        %v453 = vpack.c.b16 %v446, %v445
        %v454 = vpack.c.b16 %v448, %v447
        %v455 = vpack.c.b16 %v450, %v449
        %v456 = vpack.c.b16 %v452, %v451
        %vm461 = vcmask 523264
        %v463 = vsel %vm461, %v421, 0
        %465 = vmatprep.subr.bf16.mxu0 0
        %466 = vmatpush1.bf16.msra.mxu0 %v453
        %467 = vmatprep.subr.bf16.mxu0 0
        %468 = vmatpush1.bf16.msra.mxu0 %v454
        %469 = vmatprep.subr.bf16.mxu0 0
        %470 = vmatpush1.bf16.msra.mxu0 %v455
        %471 = vmatprep.subr.bf16.mxu0 0
        %472 = vmatpush1.bf16.msra.mxu0 %v456
        %473 = vmatprep.subr.bf16.mxu0 0
        %474 = vmatpush1.bf16.msra.mxu0 0
        %475 = vmatprep.subr.bf16.mxu0 0
        %476 = vmatpush1.bf16.msra.mxu0 0
        %477 = vmatprep.subr.bf16.mxu0 0
        %478 = vmatpush1.bf16.msra.mxu0 0
        %479 = vmatprep.subr.bf16.mxu0 0
        %480 = vmatpush1.bf16.msra.mxu0 0
        %481 = vmatprep.subr.bf16.mxu0 0
        %482 = vmatpush1.bf16.msra.mxu0 0
        %483 = vmatprep.subr.bf16.mxu0 0
        %484 = vmatpush1.bf16.msra.mxu0 0
        %485 = vmatprep.subr.bf16.mxu0 0
        %486 = vmatpush1.bf16.msra.mxu0 0
        %487 = vmatprep.subr.bf16.mxu0 0
        %488 = vmatpush1.bf16.msra.mxu0 0
        %489 = vmatprep.subr.bf16.mxu0 0
        %490 = vmatpush1.bf16.msra.mxu0 0
        %491 = vmatprep.subr.bf16.mxu0 0
        %492 = vmatpush1.bf16.msra.mxu0 0
        %493 = vmatprep.subr.bf16.mxu0 0
        %494 = vmatpush1.bf16.msra.mxu0 0
        %495 = vmatprep.subr.bf16.mxu0 0
        %496 = vmatpush1.bf16.msra.mxu0 0
        %497 = vmatprep.mubr.bf16.mxu0 0
        %498 = vmatmul.mubr.bf16.gmra.mrb[0].mxu0 %v463
        %v499 = vpop.f32.mrb[0].mxu0
        %v500 = vadd.f32 %v435, %v499
        %v501 = vpop.f32.mrb[0].mxu0
        %v502 = vpop.f32.mrb[0].mxu0
        %v503 = vpop.f32.mrb[0].mxu0
        %504 = vdwg.mxu0
        %v505 = vmax.f32 %v500, 0.0
        %v506 = vpack.c.bf16 %v505, %v505
        %v507 = vld [vmem:[#allocation12] sm:$0xff]
        %v508 = vld [vmem:[#allocation12 + $0x8] sm:$0xff]
        %v509 = vld [vmem:[#allocation12 + $0x10] sm:$0xff]
        %v510 = vld [vmem:[#allocation12 + $0x18] sm:$0xff]
        %v511 = vld [vmem:[#allocation12 + $0x20] sm:$0xff]
        %v512 = vld [vmem:[#allocation12 + $0x28] sm:$0xff]
        %v513 = vld [vmem:[#allocation12 + $0x30] sm:$0xff]
        %v514 = vld [vmem:[#allocation12 + $0x38] sm:$0xff]
        %v515 = vld [vmem:[#allocation12 + $0x40] sm:$0xff]
        %v516 = vld [vmem:[#allocation12 + $0x48] sm:$0xff]
        %v517 = vld [vmem:[#allocation12 + $0x50] sm:$0xff]
        %v518 = vld [vmem:[#allocation12 + $0x58] sm:$0xff]
        %v519 = vld [vmem:[#allocation12 + $0x60] sm:$0xff]
        %v520 = vld [vmem:[#allocation12 + $0x68] sm:$0xff]
        %v521 = vld [vmem:[#allocation12 + $0x70] sm:$0xff]
        %v522 = vld [vmem:[#allocation12 + $0x78] sm:$0xff]
        %v523 = vld [vmem:[#allocation12 + $0x80] sm:$0xff]
        %v524 = vld [vmem:[#allocation12 + $0x88] sm:$0xff]
        %v525 = vld [vmem:[#allocation12 + $0x90] sm:$0xff]
        %v526 = vld [vmem:[#allocation12 + $0x98] sm:$0xff]
        %v527 = vld [vmem:[#allocation12 + $0xa0] sm:$0xff]
        %v528 = vld [vmem:[#allocation12 + $0xa8] sm:$0xff]
        %v529 = vld [vmem:[#allocation12 + $0xb0] sm:$0xff]
        %v530 = vld [vmem:[#allocation12 + $0xb8] sm:$0xff]
        %v531 = vld [vmem:[#allocation12 + $0xc0] sm:$0xff]
        %v532 = vld [vmem:[#allocation12 + $0xc8] sm:$0xff]
        %v533 = vld [vmem:[#allocation12 + $0xd0] sm:$0xff]
        %v534 = vld [vmem:[#allocation12 + $0xd8] sm:$0xff]
        %v535 = vld [vmem:[#allocation12 + $0xe0] sm:$0xff]
        %v536 = vld [vmem:[#allocation12 + $0xe8] sm:$0xff]
        %v537 = vld [vmem:[#allocation12 + $0xf0] sm:$0xff]
        %v538 = vld [vmem:[#allocation12 + $0xf8] sm:$0xff]
        %v539 = vld [vmem:[#allocation12 + $0x100] sm:$0xff]
        %v540 = vld [vmem:[#allocation12 + $0x108] sm:$0xff]
        %v541 = vld [vmem:[#allocation12 + $0x110] sm:$0xff]
        %v542 = vld [vmem:[#allocation12 + $0x118] sm:$0xff]
        %v543 = vld [vmem:[#allocation12 + $0x120] sm:$0xff]
        %v544 = vld [vmem:[#allocation12 + $0x128] sm:$0xff]
        %v545 = vld [vmem:[#allocation12 + $0x130] sm:$0xff]
        %v546 = vld [vmem:[#allocation12 + $0x138] sm:$0xff]
        %v547 = vld [vmem:[#allocation12 + $0x140] sm:$0xff]
        %v548 = vld [vmem:[#allocation12 + $0x148] sm:$0xff]
        %v549 = vld [vmem:[#allocation12 + $0x150] sm:$0xff]
        %v550 = vld [vmem:[#allocation12 + $0x158] sm:$0xff]
        %v551 = vld [vmem:[#allocation12 + $0x160] sm:$0xff]
        %v552 = vld [vmem:[#allocation12 + $0x168] sm:$0xff]
        %v553 = vld [vmem:[#allocation12 + $0x170] sm:$0xff]
        %v554 = vld [vmem:[#allocation12 + $0x178] sm:$0xff]
        %v555 = vld [vmem:[#allocation12 + $0x180] sm:$0xff]
        %v556 = vld [vmem:[#allocation12 + $0x188] sm:$0xff]
        %v557 = vld [vmem:[#allocation12 + $0x190] sm:$0xff]
        %v558 = vld [vmem:[#allocation12 + $0x198] sm:$0xff]
        %v559 = vld [vmem:[#allocation12 + $0x1a0] sm:$0xff]
        %v560 = vld [vmem:[#allocation12 + $0x1a8] sm:$0xff]
        %v561 = vld [vmem:[#allocation12 + $0x1b0] sm:$0xff]
        %v562 = vld [vmem:[#allocation12 + $0x1b8] sm:$0xff]
        %v563 = vld [vmem:[#allocation12 + $0x1c0] sm:$0xff]
        %v564 = vld [vmem:[#allocation12 + $0x1c8] sm:$0xff]
        %v565 = vld [vmem:[#allocation12 + $0x1d0] sm:$0xff]
        %v566 = vld [vmem:[#allocation12 + $0x1d8] sm:$0xff]
        %v567 = vld [vmem:[#allocation12 + $0x1e0] sm:$0xff]
        %v568 = vld [vmem:[#allocation12 + $0x1e8] sm:$0xff]
        %v569 = vld [vmem:[#allocation12 + $0x1f0] sm:$0xff]
        %v570 = vld [vmem:[#allocation12 + $0x1f8] sm:$0xff]
        %v635 = vunpack.c.l.b16 %v507
        %v636 = vunpack.c.h.b16 %v507
        %v637 = vunpack.c.l.b16 %v508
        %v638 = vunpack.c.h.b16 %v508
        %v639 = vunpack.c.l.b16 %v509
        %v640 = vunpack.c.h.b16 %v509
        %v641 = vunpack.c.l.b16 %v510
        %v642 = vunpack.c.h.b16 %v510
        %v643 = vunpack.c.l.b16 %v511
        %v644 = vunpack.c.h.b16 %v511
        %v645 = vunpack.c.l.b16 %v512
        %v646 = vunpack.c.h.b16 %v512
        %v647 = vunpack.c.l.b16 %v513
        %v648 = vunpack.c.h.b16 %v513
        %v649 = vunpack.c.l.b16 %v514
        %v650 = vunpack.c.h.b16 %v514
        %v651 = vunpack.c.l.b16 %v515
        %v652 = vunpack.c.h.b16 %v515
        %v653 = vunpack.c.l.b16 %v516
        %v654 = vunpack.c.h.b16 %v516
        %v655 = vunpack.c.l.b16 %v517
        %v656 = vunpack.c.h.b16 %v517
        %v657 = vunpack.c.l.b16 %v518
        %v658 = vunpack.c.h.b16 %v518
        %v659 = vunpack.c.l.b16 %v519
        %v660 = vunpack.c.h.b16 %v519
        %v661 = vunpack.c.l.b16 %v520
        %v662 = vunpack.c.h.b16 %v520
        %v663 = vunpack.c.l.b16 %v521
        %v664 = vunpack.c.h.b16 %v521
        %v665 = vunpack.c.l.b16 %v522
        %v666 = vunpack.c.h.b16 %v522
        %v667 = vunpack.c.l.b16 %v523
        %v668 = vunpack.c.h.b16 %v523
        %v669 = vunpack.c.l.b16 %v524
        %v670 = vunpack.c.h.b16 %v524
        %v671 = vunpack.c.l.b16 %v525
        %v672 = vunpack.c.h.b16 %v525
        %v673 = vunpack.c.l.b16 %v526
        %v674 = vunpack.c.h.b16 %v526
        %v675 = vunpack.c.l.b16 %v527
        %v676 = vunpack.c.h.b16 %v527
        %v677 = vunpack.c.l.b16 %v528
        %v678 = vunpack.c.h.b16 %v528
        %v679 = vunpack.c.l.b16 %v529
        %v680 = vunpack.c.h.b16 %v529
        %v681 = vunpack.c.l.b16 %v530
        %v682 = vunpack.c.h.b16 %v530
        %v683 = vunpack.c.l.b16 %v531
        %v684 = vunpack.c.h.b16 %v531
        %v685 = vunpack.c.l.b16 %v532
        %v686 = vunpack.c.h.b16 %v532
        %v687 = vunpack.c.l.b16 %v533
        %v688 = vunpack.c.h.b16 %v533
        %v689 = vunpack.c.l.b16 %v534
        %v690 = vunpack.c.h.b16 %v534
        %v691 = vunpack.c.l.b16 %v535
        %v692 = vunpack.c.h.b16 %v535
        %v693 = vunpack.c.l.b16 %v536
        %v694 = vunpack.c.h.b16 %v536
        %v695 = vunpack.c.l.b16 %v537
        %v696 = vunpack.c.h.b16 %v537
        %v697 = vunpack.c.l.b16 %v538
        %v698 = vunpack.c.h.b16 %v538
        %v699 = vunpack.c.l.b16 %v539
        %v700 = vunpack.c.h.b16 %v539
        %v701 = vunpack.c.l.b16 %v540
        %v702 = vunpack.c.h.b16 %v540
        %v703 = vunpack.c.l.b16 %v541
        %v704 = vunpack.c.h.b16 %v541
        %v705 = vunpack.c.l.b16 %v542
        %v706 = vunpack.c.h.b16 %v542
        %v707 = vunpack.c.l.b16 %v543
        %v708 = vunpack.c.h.b16 %v543
        %v709 = vunpack.c.l.b16 %v544
        %v710 = vunpack.c.h.b16 %v544
        %v711 = vunpack.c.l.b16 %v545
        %v712 = vunpack.c.h.b16 %v545
        %v713 = vunpack.c.l.b16 %v546
        %v714 = vunpack.c.h.b16 %v546
        %v715 = vunpack.c.l.b16 %v547
        %v716 = vunpack.c.h.b16 %v547
        %v717 = vunpack.c.l.b16 %v548
        %v718 = vunpack.c.h.b16 %v548
        %v719 = vunpack.c.l.b16 %v549
        %v720 = vunpack.c.h.b16 %v549
        %v721 = vunpack.c.l.b16 %v550
        %v722 = vunpack.c.h.b16 %v550
        %v723 = vunpack.c.l.b16 %v551
        %v724 = vunpack.c.h.b16 %v551
        %v725 = vunpack.c.l.b16 %v552
        %v726 = vunpack.c.h.b16 %v552
        %v727 = vunpack.c.l.b16 %v553
        %v728 = vunpack.c.h.b16 %v553
        %v729 = vunpack.c.l.b16 %v554
        %v730 = vunpack.c.h.b16 %v554
        %v731 = vunpack.c.l.b16 %v555
        %v732 = vunpack.c.h.b16 %v555
        %v733 = vunpack.c.l.b16 %v556
        %v734 = vunpack.c.h.b16 %v556
        %v735 = vunpack.c.l.b16 %v557
        %v736 = vunpack.c.h.b16 %v557
        %v737 = vunpack.c.l.b16 %v558
        %v738 = vunpack.c.h.b16 %v558
        %v739 = vunpack.c.l.b16 %v559
        %v740 = vunpack.c.h.b16 %v559
        %v741 = vunpack.c.l.b16 %v560
        %v742 = vunpack.c.h.b16 %v560
        %v743 = vunpack.c.l.b16 %v561
        %v744 = vunpack.c.h.b16 %v561
        %v745 = vunpack.c.l.b16 %v562
        %v746 = vunpack.c.h.b16 %v562
        %v747 = vunpack.c.l.b16 %v563
        %v748 = vunpack.c.h.b16 %v563
        %v749 = vunpack.c.l.b16 %v564
        %v750 = vunpack.c.h.b16 %v564
        %v751 = vunpack.c.l.b16 %v565
        %v752 = vunpack.c.h.b16 %v565
        %v753 = vunpack.c.l.b16 %v566
        %v754 = vunpack.c.h.b16 %v566
        %v755 = vunpack.c.l.b16 %v567
        %v756 = vunpack.c.h.b16 %v567
        %v757 = vunpack.c.l.b16 %v568
        %v758 = vunpack.c.h.b16 %v568
        %v759 = vunpack.c.l.b16 %v569
        %v760 = vunpack.c.h.b16 %v569
        %v761 = vunpack.c.l.b16 %v570
        %v762 = vunpack.c.h.b16 %v570
        %v763 = vpack.c.b16 %v643, %v635
        %v764 = vpack.c.b16 %v644, %v636
        %v765 = vpack.c.b16 %v645, %v637
        %v766 = vpack.c.b16 %v646, %v638
        %v767 = vpack.c.b16 %v647, %v639
        %v768 = vpack.c.b16 %v648, %v640
        %v769 = vpack.c.b16 %v649, %v641
        %v770 = vpack.c.b16 %v650, %v642
        %v771 = vpack.c.b16 %v659, %v651
        %v772 = vpack.c.b16 %v660, %v652
        %v773 = vpack.c.b16 %v661, %v653
        %v774 = vpack.c.b16 %v662, %v654
        %v775 = vpack.c.b16 %v663, %v655
        %v776 = vpack.c.b16 %v664, %v656
        %v777 = vpack.c.b16 %v665, %v657
        %v778 = vpack.c.b16 %v666, %v658
        %v779 = vpack.c.b16 %v675, %v667
        %v780 = vpack.c.b16 %v676, %v668
        %v781 = vpack.c.b16 %v677, %v669
        %v782 = vpack.c.b16 %v678, %v670
        %v783 = vpack.c.b16 %v679, %v671
        %v784 = vpack.c.b16 %v680, %v672
        %v785 = vpack.c.b16 %v681, %v673
        %v786 = vpack.c.b16 %v682, %v674
        %v787 = vpack.c.b16 %v691, %v683
        %v788 = vpack.c.b16 %v692, %v684
        %v789 = vpack.c.b16 %v693, %v685
        %v790 = vpack.c.b16 %v694, %v686
        %v791 = vpack.c.b16 %v695, %v687
        %v792 = vpack.c.b16 %v696, %v688
        %v793 = vpack.c.b16 %v697, %v689
        %v794 = vpack.c.b16 %v698, %v690
        %v795 = vpack.c.b16 %v707, %v699
        %v796 = vpack.c.b16 %v708, %v700
        %v797 = vpack.c.b16 %v709, %v701
        %v798 = vpack.c.b16 %v710, %v702
        %v799 = vpack.c.b16 %v711, %v703
        %v800 = vpack.c.b16 %v712, %v704
        %v801 = vpack.c.b16 %v713, %v705
        %v802 = vpack.c.b16 %v714, %v706
        %v803 = vpack.c.b16 %v723, %v715
        %v804 = vpack.c.b16 %v724, %v716
        %v805 = vpack.c.b16 %v725, %v717
        %v806 = vpack.c.b16 %v726, %v718
        %v807 = vpack.c.b16 %v727, %v719
        %v808 = vpack.c.b16 %v728, %v720
        %v809 = vpack.c.b16 %v729, %v721
        %v810 = vpack.c.b16 %v730, %v722
        %v811 = vpack.c.b16 %v739, %v731
        %v812 = vpack.c.b16 %v740, %v732
        %v813 = vpack.c.b16 %v741, %v733
        %v814 = vpack.c.b16 %v742, %v734
        %v815 = vpack.c.b16 %v743, %v735
        %v816 = vpack.c.b16 %v744, %v736
        %v817 = vpack.c.b16 %v745, %v737
        %v818 = vpack.c.b16 %v746, %v738
        %v819 = vpack.c.b16 %v755, %v747
        %v820 = vpack.c.b16 %v756, %v748
        %v821 = vpack.c.b16 %v757, %v749
        %v822 = vpack.c.b16 %v758, %v750
        %v823 = vpack.c.b16 %v759, %v751
        %v824 = vpack.c.b16 %v760, %v752
        %v825 = vpack.c.b16 %v761, %v753
        %v826 = vpack.c.b16 %v762, %v754
        %891 = vmatprep.subr.bf16.mxu0 %v764
        %892 = vmatpush1.bf16.msra.mxu0 %v763
        %893 = vmatprep.subr.bf16.mxu0 %v772
        %894 = vmatpush1.bf16.msra.mxu0 %v771
        %895 = vmatprep.subr.bf16.mxu0 %v780
        %896 = vmatpush1.bf16.msra.mxu0 %v779
        %897 = vmatprep.subr.bf16.mxu0 %v788
        %898 = vmatpush1.bf16.msra.mxu0 %v787
        %899 = vmatprep.subr.bf16.mxu0 %v796
        %900 = vmatpush1.bf16.msra.mxu0 %v795
        %901 = vmatprep.subr.bf16.mxu0 %v804
        %902 = vmatpush1.bf16.msra.mxu0 %v803
        %903 = vmatprep.subr.bf16.mxu0 %v812
        %904 = vmatpush1.bf16.msra.mxu0 %v811
        %905 = vmatprep.subr.bf16.mxu0 %v820
        %906 = vmatpush1.bf16.msra.mxu0 %v819
        %907 = vmatprep.subr.bf16.mxu0 0
        %908 = vmatpush1.bf16.msra.mxu0 0
        %909 = vmatprep.subr.bf16.mxu0 0
        %910 = vmatpush1.bf16.msra.mxu0 0
        %911 = vmatprep.subr.bf16.mxu0 0
        %912 = vmatpush1.bf16.msra.mxu0 0
        %913 = vmatprep.subr.bf16.mxu0 0
        %914 = vmatpush1.bf16.msra.mxu0 0
        %915 = vmatprep.subr.bf16.mxu0 0
        %916 = vmatpush1.bf16.msra.mxu0 0
        %917 = vmatprep.subr.bf16.mxu0 0
        %918 = vmatpush1.bf16.msra.mxu0 0
        %919 = vmatprep.subr.bf16.mxu0 0
        %920 = vmatpush1.bf16.msra.mxu0 0
        %921 = vmatprep.subr.bf16.mxu0 0
        %922 = vmatpush1.bf16.msra.mxu0 0
        %923 = vmatprep.mubr.bf16.mxu0 0
        %924 = vmatmul.mubr.bf16.gmra.mrb[0].mxu0 %v506
        %v925 = vpop.f32.mrb[0].mxu0
        %v926 = vadd.f32 0.0, %v925
        %v927 = vpop.f32.mrb[0].mxu0
        %v928 = vadd.f32 0.0, %v927
        %v929 = vpop.f32.mrb[0].mxu0
        %v930 = vpop.f32.mrb[0].mxu0
        %931 = vdwg.mxu0
        %932 = vmatprep.subr.bf16.mxu0 %v766
        %933 = vmatpush1.bf16.msra.mxu0 %v765
        %934 = vmatprep.subr.bf16.mxu0 %v774
        %935 = vmatpush1.bf16.msra.mxu0 %v773
        %936 = vmatprep.subr.bf16.mxu0 %v782
        %937 = vmatpush1.bf16.msra.mxu0 %v781
        %938 = vmatprep.subr.bf16.mxu0 %v790
        %939 = vmatpush1.bf16.msra.mxu0 %v789
        %940 = vmatprep.subr.bf16.mxu0 %v798
        %941 = vmatpush1.bf16.msra.mxu0 %v797
        %942 = vmatprep.subr.bf16.mxu0 %v806
        %943 = vmatpush1.bf16.msra.mxu0 %v805
        %944 = vmatprep.subr.bf16.mxu0 %v814
        %945 = vmatpush1.bf16.msra.mxu0 %v813
        %946 = vmatprep.subr.bf16.mxu0 %v822
        %947 = vmatpush1.bf16.msra.mxu0 %v821
        %948 = vmatprep.subr.bf16.mxu0 0
        %949 = vmatpush1.bf16.msra.mxu0 0
        %950 = vmatprep.subr.bf16.mxu0 0
        %951 = vmatpush1.bf16.msra.mxu0 0
        %952 = vmatprep.subr.bf16.mxu0 0
        %953 = vmatpush1.bf16.msra.mxu0 0
        %954 = vmatprep.subr.bf16.mxu0 0
        %955 = vmatpush1.bf16.msra.mxu0 0
        %956 = vmatprep.subr.bf16.mxu0 0
        %957 = vmatpush1.bf16.msra.mxu0 0
        %958 = vmatprep.subr.bf16.mxu0 0
        %959 = vmatpush1.bf16.msra.mxu0 0
        %960 = vmatprep.subr.bf16.mxu0 0
        %961 = vmatpush1.bf16.msra.mxu0 0
        %962 = vmatprep.subr.bf16.mxu0 0
        %963 = vmatpush1.bf16.msra.mxu0 0
        %964 = vmatprep.mubr.bf16.mxu0 0
        %965 = vmatmul.mubr.bf16.gmra.mrb[0].mxu0 %v506
        %v966 = vpop.f32.mrb[0].mxu0
        %v967 = vadd.f32 0.0, %v966
        %v968 = vpop.f32.mrb[0].mxu0
        %v969 = vadd.f32 0.0, %v968
        %v970 = vpop.f32.mrb[0].mxu0
        %v971 = vpop.f32.mrb[0].mxu0
        %972 = vdwg.mxu0
        %973 = vmatprep.subr.bf16.mxu0 %v768
        %974 = vmatpush1.bf16.msra.mxu0 %v767
        %975 = vmatprep.subr.bf16.mxu0 %v776
        %976 = vmatpush1.bf16.msra.mxu0 %v775
        %977 = vmatprep.subr.bf16.mxu0 %v784
        %978 = vmatpush1.bf16.msra.mxu0 %v783
        %979 = vmatprep.subr.bf16.mxu0 %v792
        %980 = vmatpush1.bf16.msra.mxu0 %v791
        %981 = vmatprep.subr.bf16.mxu0 %v800
        %982 = vmatpush1.bf16.msra.mxu0 %v799
        %983 = vmatprep.subr.bf16.mxu0 %v808
        %984 = vmatpush1.bf16.msra.mxu0 %v807
        %985 = vmatprep.subr.bf16.mxu0 %v816
        %986 = vmatpush1.bf16.msra.mxu0 %v815
        %987 = vmatprep.subr.bf16.mxu0 %v824
        %988 = vmatpush1.bf16.msra.mxu0 %v823
        %989 = vmatprep.subr.bf16.mxu0 0
        %990 = vmatpush1.bf16.msra.mxu0 0
        %991 = vmatprep.subr.bf16.mxu0 0
        %992 = vmatpush1.bf16.msra.mxu0 0
        %993 = vmatprep.subr.bf16.mxu0 0
        %994 = vmatpush1.bf16.msra.mxu0 0
        %995 = vmatprep.subr.bf16.mxu0 0
        %996 = vmatpush1.bf16.msra.mxu0 0
        %997 = vmatprep.subr.bf16.mxu0 0
        %998 = vmatpush1.bf16.msra.mxu0 0
        %999 = vmatprep.subr.bf16.mxu0 0
        %1000 = vmatpush1.bf16.msra.mxu0 0
        %1001 = vmatprep.subr.bf16.mxu0 0
        %1002 = vmatpush1.bf16.msra.mxu0 0
        %1003 = vmatprep.subr.bf16.mxu0 0
        %1004 = vmatpush1.bf16.msra.mxu0 0
        %1005 = vmatprep.mubr.bf16.mxu0 0
        %1006 = vmatmul.mubr.bf16.gmra.mrb[0].mxu0 %v506
        %v1007 = vpop.f32.mrb[0].mxu0
        %v1008 = vadd.f32 0.0, %v1007
        %v1009 = vpop.f32.mrb[0].mxu0
        %v1010 = vadd.f32 0.0, %v1009
        %v1011 = vpop.f32.mrb[0].mxu0
        %v1012 = vpop.f32.mrb[0].mxu0
        %1013 = vdwg.mxu0
        %1014 = vmatprep.subr.bf16.mxu0 %v770
        %1015 = vmatpush1.bf16.msra.mxu0 %v769
        %1016 = vmatprep.subr.bf16.mxu0 %v778
        %1017 = vmatpush1.bf16.msra.mxu0 %v777
        %1018 = vmatprep.subr.bf16.mxu0 %v786
        %1019 = vmatpush1.bf16.msra.mxu0 %v785
        %1020 = vmatprep.subr.bf16.mxu0 %v794
        %1021 = vmatpush1.bf16.msra.mxu0 %v793
        %1022 = vmatprep.subr.bf16.mxu0 %v802
        %1023 = vmatpush1.bf16.msra.mxu0 %v801
        %1024 = vmatprep.subr.bf16.mxu0 %v810
        %1025 = vmatpush1.bf16.msra.mxu0 %v809
        %1026 = vmatprep.subr.bf16.mxu0 %v818
        %1027 = vmatpush1.bf16.msra.mxu0 %v817
        %1028 = vmatprep.subr.bf16.mxu0 %v826
        %1029 = vmatpush1.bf16.msra.mxu0 %v825
        %1030 = vmatprep.subr.bf16.mxu0 0
        %1031 = vmatpush1.bf16.msra.mxu0 0
        %1032 = vmatprep.subr.bf16.mxu0 0
        %1033 = vmatpush1.bf16.msra.mxu0 0
        %1034 = vmatprep.subr.bf16.mxu0 0
        %1035 = vmatpush1.bf16.msra.mxu0 0
        %1036 = vmatprep.subr.bf16.mxu0 0
        %1037 = vmatpush1.bf16.msra.mxu0 0
        %1038 = vmatprep.subr.bf16.mxu0 0
        %1039 = vmatpush1.bf16.msra.mxu0 0
        %1040 = vmatprep.subr.bf16.mxu0 0
        %1041 = vmatpush1.bf16.msra.mxu0 0
        %1042 = vmatprep.subr.bf16.mxu0 0
        %1043 = vmatpush1.bf16.msra.mxu0 0
        %1044 = vmatprep.subr.bf16.mxu0 0
        %1045 = vmatpush1.bf16.msra.mxu0 0
        %1046 = vmatprep.mubr.bf16.mxu0 0
        %1047 = vmatmul.mubr.bf16.gmra.mrb[0].mxu0 %v506
        %v1048 = vpop.f32.mrb[0].mxu0
        %v1049 = vadd.f32 0.0, %v1048
        %v1050 = vpop.f32.mrb[0].mxu0
        %v1051 = vadd.f32 0.0, %v1050
        %v1052 = vpop.f32.mrb[0].mxu0
        %v1053 = vpop.f32.mrb[0].mxu0
        %1054 = vdwg.mxu0
        %v1055 = vld [vmem:[#allocation2] sm:$0xff]
        %v1056 = vld [vmem:[#allocation2 + $0x8] sm:$0xff]
        %v1057 = vld [vmem:[#allocation2 + $0x10] sm:$0xff]
        %v1058 = vld [vmem:[#allocation2 + $0x18] sm:$0xff]
        %v1059 = vld [vmem:[#allocation2 + $0x20] sm:$0xff]
        %v1060 = vld [vmem:[#allocation2 + $0x28] sm:$0xff]
        %v1061 = vld [vmem:[#allocation2 + $0x30] sm:$0xff]
        %v1062 = vld [vmem:[#allocation2 + $0x38] sm:$0xff]
        %v1063 = vmax.f32 %v1055, %v926
        %v1064 = vmax.f32 %v1056, %v928
        %v1065 = vmax.f32 %v1057, %v967
        %v1066 = vmax.f32 %v1058, %v969
        %v1067 = vmax.f32 %v1059, %v1008
        %v1068 = vmax.f32 %v1060, %v1010
        %v1069 = vmax.f32 %v1061, %v1049
        %v1070 = vmax.f32 %v1062, %v1051
        %1071 = vst [vmem:[#allocation2] sm:$0xff] %v1063
        %1072 = vst [vmem:[#allocation2 + $0x8] sm:$0xff] %v1064
        %1073 = vst [vmem:[#allocation2 + $0x10] sm:$0xff] %v1065
        %1074 = vst [vmem:[#allocation2 + $0x18] sm:$0xff] %v1066
        %1075 = vst [vmem:[#allocation2 + $0x20] sm:$0xff] %v1067
        %1076 = vst [vmem:[#allocation2 + $0x28] sm:$0xff] %v1068
        %1077 = vst [vmem:[#allocation2 + $0x30] sm:$0xff] %v1069
        %1078 = vst [vmem:[#allocation2 + $0x38] sm:$0xff] %v1070
        %p1079 = scmp.eq.s32.totalorder %s31, 1
        // Predicated region
        $region73: #{tpu_custom_call.1} parent=43 // pred_check
          %p1080 = pneg %p1079
        $region74: #{tpu_custom_call.1} parent=43 // pred_check_branch
          %1082 = sbr.rel (%p1080) target = $region76
        $region75: #{tpu_custom_call.1} parent=43 // pred_region
          %v1083 = vld [vmem:[#allocation2] sm:$0xff]
          %v1084 = vld [vmem:[#allocation2 + $0x8] sm:$0xff]
          %v1085 = vld [vmem:[#allocation2 + $0x10] sm:$0xff]
          %v1086 = vld [vmem:[#allocation2 + $0x18] sm:$0xff]
          %v1087 = vld [vmem:[#allocation2 + $0x20] sm:$0xff]
          %v1088 = vld [vmem:[#allocation2 + $0x28] sm:$0xff]
          %v1089 = vld [vmem:[#allocation2 + $0x30] sm:$0xff]
          %v1090 = vld [vmem:[#allocation2 + $0x38] sm:$0xff]
          %v1091 = vrot.slane %v1083, 4
          %v1092 = vmax.f32 %v1083, %v1091
          %v1093 = vrot.slane %v1092, 2
          %v1094 = vmax.f32 %v1092, %v1093
          %v1095 = vrot.slane %v1094, 1
          %v1096 = vmax.f32 %v1094, %v1095
          %v1097 = vrot.slane %v1084, 4
          %v1098 = vmax.f32 %v1084, %v1097
          %v1099 = vrot.slane %v1098, 2
          %v1100 = vmax.f32 %v1098, %v1099
          %v1101 = vrot.slane %v1100, 1
          %v1102 = vmax.f32 %v1100, %v1101
          %v1103 = vrot.slane %v1085, 4
          %v1104 = vmax.f32 %v1085, %v1103
          %v1105 = vrot.slane %v1104, 2
          %v1106 = vmax.f32 %v1104, %v1105
          %v1107 = vrot.slane %v1106, 1
          %v1108 = vmax.f32 %v1106, %v1107
          %v1109 = vrot.slane %v1086, 4
          %v1110 = vmax.f32 %v1086, %v1109
          %v1111 = vrot.slane %v1110, 2
          %v1112 = vmax.f32 %v1110, %v1111
          %v1113 = vrot.slane %v1112, 1
          %v1114 = vmax.f32 %v1112, %v1113
          %v1115 = vrot.slane %v1087, 4
          %v1116 = vmax.f32 %v1087, %v1115
          %v1117 = vrot.slane %v1116, 2
          %v1118 = vmax.f32 %v1116, %v1117
          %v1119 = vrot.slane %v1118, 1
          %v1120 = vmax.f32 %v1118, %v1119
          %v1121 = vrot.slane %v1088, 4
          %v1122 = vmax.f32 %v1088, %v1121
          %v1123 = vrot.slane %v1122, 2
          %v1124 = vmax.f32 %v1122, %v1123
          %v1125 = vrot.slane %v1124, 1
          %v1126 = vmax.f32 %v1124, %v1125
          %v1127 = vrot.slane %v1089, 4
          %v1128 = vmax.f32 %v1089, %v1127
          %v1129 = vrot.slane %v1128, 2
          %v1130 = vmax.f32 %v1128, %v1129
          %v1131 = vrot.slane %v1130, 1
          %v1132 = vmax.f32 %v1130, %v1131
          %v1133 = vrot.slane %v1090, 4
          %v1134 = vmax.f32 %v1090, %v1133
          %v1135 = vrot.slane %v1134, 2
          %v1136 = vmax.f32 %v1134, %v1135
          %v1137 = vrot.slane %v1136, 1
          %v1138 = vmax.f32 %v1136, %v1137
          %v1147 = vcombine.low %v1096, %v1102
          %v1148 = vcombine.low %v1108, %v1114
          %v1149 = vcombine.low %v1120, %v1126
          %v1150 = vcombine.low %v1132, %v1138
          %v1152 = vunpack.c.l.s4 1966171168
          %v1153 = vunpack.c.0.s8 %v1152
          %v1154 = vlaneseq
          %v1155 = vshrl.u32 %v1154, 7
          %v1156 = vsub.s32 %v1153, %v1155
          %v1157 = vrot.slane %v1147, %v1156
          %v1159 = vunpack.c.l.s4 1966171168
          %v1160 = vunpack.c.0.s8 %v1159
          %v1161 = vlaneseq
          %v1162 = vshrl.u32 %v1161, 7
          %v1163 = vsub.s32 %v1160, %v1162
          %v1164 = vrot.slane %v1148, %v1163
          %v1166 = vunpack.c.l.s4 1966171168
          %v1167 = vunpack.c.0.s8 %v1166
          %v1168 = vlaneseq
          %v1169 = vshrl.u32 %v1168, 7
          %v1170 = vsub.s32 %v1167, %v1169
          %v1171 = vrot.slane %v1149, %v1170
          %v1173 = vunpack.c.l.s4 1966171168
          %v1174 = vunpack.c.0.s8 %v1173
          %v1175 = vlaneseq
          %v1176 = vshrl.u32 %v1175, 7
          %v1177 = vsub.s32 %v1174, %v1176
          %v1178 = vrot.slane %v1150, %v1177
          %v1179 = vcombine.low %v1157, %v1164
          %v1180 = vcombine.low %v1171, %v1178
          %v1182 = vunpack.c.l.s4 1966171168
          %v1183 = vunpack.c.0.s8 %v1182
          %v1184 = vlaneseq
          %v1185 = vshrl.u32 %v1184, 7
          %v1186 = vsub.s32 %v1183, %v1185
          %v1187 = vrot.slane %v1179, %v1186
          %v1189 = vunpack.c.l.s4 1966171168
          %v1190 = vunpack.c.0.s8 %v1189
          %v1191 = vlaneseq
          %v1192 = vshrl.u32 %v1191, 7
          %v1193 = vsub.s32 %v1190, %v1192
          %v1194 = vrot.slane %v1180, %v1193
          %v1195 = vcombine.low %v1187, %v1194
          %1197 = vst [vmem:[%s349] sm:$0xff] %v1195
        $region76: #{tpu_custom_call.1} parent=43 // pred_fallthru
          _
        %s1198 = sand.u32 %s179, 1
        %s1199 = scalar_lea.sflag [#allocation5], %s1198
        %s1200 = sand.u32 %s179, 1
        %s1201 = smul.addr %s1200, 8
        %s1202 = scalar_lea.vmem [#allocation14], %s1201
        // Predicated region
        $region77: #{tpu_custom_call.1} parent=43 // pred_check
          %p1203 = pneg %p189
        $region78: #{tpu_custom_call.1} parent=43 // pred_check_branch
          %1205 = sbr.rel (%p1203) target = $region80
        $region79: #{tpu_custom_call.1} parent=43 // pred_region
          %s1207 = ssub.s32 128, 128
          %1208 = vsyncadd %s1199, %s1207
          %s1209 = smul.addr %s30, 8
          %s1210 = smul.addr %s1209, 16
          %s1211 = scalar_lea.hbm %s6, %s1210
          %s1213 = sshll.u32 %s1202, 4
          %s1214 = int_to_ptr.vmem [resolvable:$true] %s1213
          %1216 = dma.vmem_to_hbm [thread:$0]  %s1214, 128, %s1211, %s1199
        $region80: #{tpu_custom_call.1} parent=43 // pred_fallthru
          _
      $region44: #{tpu_custom_call.1} parent=5 // pred_fallthru
        _
      %p1217 = scmp.le.s32.totalorder 2, %s21
      // Predicated region
      $region81: #{tpu_custom_call.1} parent=5 // pred_check
        %p1218 = pneg %p1217
      $region82: #{tpu_custom_call.1} parent=5 // pred_check_branch
        %1220 = sbr.rel (%p1218) target = $region84
      $region83: #{tpu_custom_call.1} parent=5 // pred_region
        %s1221 = ssub.s32 %s21, 2
        // Predicated region
        $region85: #{tpu_custom_call.1} parent=83 // pred_check
          %p1222 = pneg %p195
        $region86: #{tpu_custom_call.1} parent=83 // pred_check_branch
          %1224 = sbr.rel (%p1222) target = $region88
        $region87: #{tpu_custom_call.1} parent=83 // pred_region
          %s1225 = sand.u32 %s180, 1
          %s1226 = scalar_lea.sflag [#allocation5], %s1225
          %s1227 = sand.u32 %s180, 1
          %s1228 = smul.addr %s1227, 8
          %s1229 = scalar_lea.vmem [#allocation14], %s1228
          %1230 = dma.done %s1226, 128
        $region88: #{tpu_custom_call.1} parent=83 // pred_fallthru
          _
      $region84: #{tpu_custom_call.1} parent=5 // pred_fallthru
        _
    $region6: #{tpu_custom_call.1} parent=1 // loop_footer
      %s25 = sadd.s32 1, %s21
    $region7: #{tpu_custom_call.1} parent=1 // loop_footer_branch
      %20 = sbr.rel target = $region3
    $region8: #{tpu_custom_call.1} parent=1 // loop_exit
      _
    %1231 = vsyncpa [#allocation4], 1
    %s1232 = scalar_lea.sflag [#allocation4], 1
    %1233 = vsyncpa %s1232, 1
    %1234 = vsyncpa [#allocation7], 1
    %1235 = vsyncpa [#allocation10], 1
    %1236 = vsyncpa [#allocation13], 1
    %1237 = vsyncpa [#allocation5], 1
    %s1238 = scalar_lea.sflag [#allocation5], 1
    %1239 = vsyncpa %s1238, 1

</llo_original>
